<compile_context>
chip_gen: v7x
topology: tpu7x:2x2x1
jax: 0.10.0
libtpu: 0.0.40
codegen_flags: <defaults>
</compile_context>

<pallas_src>
import jax
import jax.numpy as jnp
import numpy as np
from jax import lax
from jax.experimental import pallas as pl
from jax.experimental.pallas import tpu as pltpu

# ----------------------------- configuration -------------------------------
N = 2            # batch
C_IN = 4         # n_inputs
C_OUT = 8        # n_outputs
L = 16           # input sequence length
K = 3            # kernel_size
DIL = 1          # dilation
P = (K - 1) * DIL            # chomp size / causal pad for conv2
L1 = L - (K - 1) * DIL       # length after conv1 (valid) == output length
NL = N * L1                  # batched lane width
EPS = 1e-5                   # BatchNorm eps
CPAD = 8                     # conv1 im2col rows per tap (C_IN padded to 8 so
                             # scratch stores land on 8-aligned sublanes)
PW = K * CPAD                # packed-parameter slab width (= 24 = K*C_OUT)


# ------------------------------- kernel ------------------------------------
def tres_block_kernel(x_ref, p_ref, out_ref, xcat_ref, zcat_ref):
    # x_ref  : (N, C_IN, L)         input, PyTorch NCL layout
    # p_ref  : (4*C_OUT, PW)        packed parameter slab:
    #            rows  0:16, cols 0:24 -> merged [conv1 ; folded downsample]
    #                                     im2col weight (tap-major, C_IN->CPAD
    #                                     zero-padded per tap; downsample rows
    #                                     only use the tap-0 column block)
    #            rows 16:24, cols 0:24 -> conv2 im2col weight (tap-major)
    #            rows 24:32, cols 0: 6 -> per-channel [b1, s1, t1, b2, s2, cf]
    # out_ref: (C_OUT, N*L1)        lane-dense output slab
    # xcat_ref: (K*CPAD, N*L1) VMEM conv1 im2col staging (dead rows stay zero)
    # zcat_ref: (K*C_OUT, N*L1) VMEM conv2 im2col staging (pad lanes stay zero)
    w1d = p_ref[0:2 * C_OUT, 0:PW]                # (16, 24) conv1 + downsample
    w2 = p_ref[2 * C_OUT:3 * C_OUT, 0:PW]         # (8, 24)  conv2
    vec = p_ref[3 * C_OUT:4 * C_OUT, 0:6]         # (8, 6)

    # hoist per-channel constants (broadcast once, reused for both batches)
    b1 = jnp.broadcast_to(vec[:, 0:1], (C_OUT, NL))
    s1 = jnp.broadcast_to(vec[:, 1:2], (C_OUT, NL))
    t1 = jnp.broadcast_to(vec[:, 2:3], (C_OUT, NL))
    b2 = jnp.broadcast_to(vec[:, 3:4], (C_OUT, NL))
    s2 = jnp.broadcast_to(vec[:, 4:5], (C_OUT, NL))
    cf = jnp.broadcast_to(vec[:, 5:6], (C_OUT, NL))

    # Zero both im2col buffers once.  Required: the unwritten pad rows / pad
    # lanes multiply zero weight columns, but stale VMEM may contain NaN and
    # 0*NaN would poison the MXU accumulation.
    xcat_ref[...] = jnp.zeros((K * CPAD, NL), jnp.float32)
    zcat_ref[...] = jnp.zeros((K * C_OUT, NL), jnp.float32)

    x = x_ref[...]                                 # (N, C_IN, L)

    # ---- conv1 (valid) + downsample 1x1, batched over lanes: ONE matmul ---
    for n in range(N):
        for k in range(K):
            xcat_ref[k * CPAD:k * CPAD + C_IN, n * L1:n * L1 + L1] = \
                x[n, :, k * DIL:k * DIL + L1]
    prd = jnp.dot(w1d, xcat_ref[...], preferred_element_type=jnp.float32)  # (16, 28)
    pre1 = prd[0:C_OUT, :]                         # conv1 pre-activation
    resid = prd[C_OUT:2 * C_OUT, :]                # sd*wd @ x[:, :, :L1]
    # ReLU -> BatchNorm1 (eval).  (Do NOT fold s1/t1 into conv2: conv2's
    # causal zero-pad lanes must stay exactly zero.)
    z = jnp.maximum(pre1 + b1, 0.0) * s1 + t1      # (8, 28)
    # TODO(synk): dropout is identity (eval mode); training would need
    # pltpu.prng_seed / prng_random_bits masking.

    # ---- conv2 (left causal pad P, then Chomp1d) as ONE im2col matmul -----
    # Last tap needs no shift: a single store covers both batches.
    zcat_ref[(K - 1) * C_OUT:K * C_OUT, :] = z
    for k in range(K - 1):
        sh = P - k * DIL                           # leading pad lanes stay zero
        for n in range(N):
            zcat_ref[k * C_OUT:(k + 1) * C_OUT, n * L1 + sh:n * L1 + L1] = \
                z[:, n * L1:n * L1 + L1 - sh]
    pre2 = jnp.dot(w2, zcat_ref[...], preferred_element_type=jnp.float32)  # (8, 28)
    o = jnp.maximum(pre2 + b2, 0.0) * s2           # ReLU -> BN2 scale

    # cf = t2 + bd*sd + td  (BN2 shift + folded downsample bias/shift).
    out_ref[...] = o + resid + cf


# ------------------------------- wrapper ------------------------------------
def _bn_affine(bn):
    g, b, m, v = bn
    s = g / jnp.sqrt(v + EPS)
    return s, b - m * s


def temporal_res_block(x_ncl, params):
    """x_ncl: (N, C_IN, L) float32 (PyTorch NCL). Returns (N, C_OUT, L1) NCL."""
    w1, b1, w2, b2, wd, bd, bn1, bn2, bnd = params
    s1, t1 = _bn_affine(bn1)
    s2, t2 = _bn_affine(bn2)
    sd, td = _bn_affine(bnd)

    # conv1 weight (C_OUT, C_IN, K) -> tap-major im2col (C_OUT, K*CPAD),
    # each per-tap C_IN block zero-padded to CPAD rows (sublane-aligned stores).
    w1t = jnp.transpose(w1, (0, 2, 1))                               # (C_OUT, K, C_IN)
    w1c = jnp.pad(w1t, ((0, 0), (0, 0), (0, CPAD - C_IN)))
    w1c = w1c.reshape(C_OUT, K * CPAD)

    # downsample 1x1 conv with down-BN scale folded in; lives in tap-0 columns.
    wdc = wd[:, :, 0] * sd[:, None]                                  # (C_OUT, C_IN)
    wdrow = jnp.pad(wdc, ((0, 0), (0, K * CPAD - C_IN)))             # (C_OUT, 24)
    w1d = jnp.concatenate([w1c, wdrow], axis=0)                      # (16, 24)

    # conv2 weight -> tap-major im2col form.
    w2c = jnp.transpose(w2, (0, 2, 1)).reshape(C_OUT, K * C_OUT)     # (8, 24)

    cf = t2 + bd * sd + td                                           # single final bias
    vec = jnp.stack([b1, s1, t1, b2, s2, cf], axis=1)                # (8, 6)
    vecp = jnp.pad(vec, ((0, 0), (0, PW - 6)))                       # (8, 24)

    # One packed parameter slab -> one input DMA instead of four.
    pslab = jnp.concatenate([w1d, w2c, vecp], axis=0).astype(jnp.float32)  # (32, 24)

    out = pl.pallas_call(
        tres_block_kernel,
        out_shape=jax.ShapeDtypeStruct((C_OUT, NL), jnp.float32),
        grid_spec=pltpu.PrefetchScalarGridSpec(
            num_scalar_prefetch=0,
            grid=(1,),                              # whole problem in one grid step
            in_specs=[
                pl.BlockSpec((N, C_IN, L), lambda i: (0, 0, 0)),
                pl.BlockSpec((4 * C_OUT, PW), lambda i: (0, 0)),
            ],
            out_specs=pl.BlockSpec((C_OUT, NL), lambda i: (0, 0)),
            scratch_shapes=[
                pltpu.VMEM((K * CPAD, NL), jnp.float32),   # conv1 im2col buffer
                pltpu.VMEM((K * C_OUT, NL), jnp.float32),  # conv2 im2col buffer
            ],
        ),
        compiler_params=pltpu.CompilerParams(dimension_semantics=("arbitrary",)),
    )(x_ncl.astype(jnp.float32), pslab)

    # lane-dense kernel output (C_OUT, N*L1) -> PyTorch NCL (N, C_OUT, L1).
    return jnp.transpose(out.reshape(C_OUT, N, L1), (1, 0, 2))


# --------------------------- pure-JAX reference ------------------------------
def _conv1d_ref(x, w, b, dilation, padding):
    out = lax.conv_general_dilated(
        x, w, window_strides=(1,), padding=[(padding, padding)],
        rhs_dilation=(dilation,), dimension_numbers=("NCH", "OIH", "NCH"))
    return out + b[None, :, None]


def _bn_ref(x, bn):
    g, b, m, v = bn
    return ((x - m[None, :, None]) / jnp.sqrt(v[None, :, None] + EPS)
            * g[None, :, None] + b[None, :, None])


def forward_ref(x, params):
    w1, b1, w2, b2, wd, bd, bn1, bn2, bnd = params
    y = _conv1d_ref(x, w1, b1, DIL, 0)
    y = jax.nn.relu(y)
    y = _bn_ref(y, bn1)
    y = _conv1d_ref(y, w2, b2, DIL, P)
    y = y[:, :, :-P]                                  # Chomp1d
    y = jax.nn.relu(y)
    y = _bn_ref(y, bn2)
    res = x[:, :, :-P]                                # time_select (stride == 1)
    res = _conv1d_ref(res, wd, bd, 1, 0)              # down_conv (1x1)
    res = _bn_ref(res, bnd)
    return y + res


# --------------------------------- main --------------------------------------
if __name__ == "__main__":
    key = jax.random.PRNGKey(0)
    ks = jax.random.split(key, 16)

    x = jax.random.normal(ks[0], (N, C_IN, L), dtype=jnp.float32)

    w1 = jax.random.normal(ks[1], (C_OUT, C_IN, K), dtype=jnp.float32) * 0.3
    b1 = jax.random.normal(ks[2], (C_OUT,), dtype=jnp.float32) * 0.1
    w2 = jax.random.normal(ks[3], (C_OUT, C_OUT, K), dtype=jnp.float32) * 0.3
    b2 = jax.random.normal(ks[4], (C_OUT,), dtype=jnp.float32) * 0.1
    wd = jax.random.normal(ks[5], (C_OUT, C_IN, 1), dtype=jnp.float32) * 0.3
    bd = jax.random.normal(ks[6], (C_OUT,), dtype=jnp.float32) * 0.1

    def make_bn(k):
        kk = jax.random.split(k, 4)
        gamma = 1.0 + 0.2 * jax.random.normal(kk[0], (C_OUT,), dtype=jnp.float32)
        beta = 0.1 * jax.random.normal(kk[1], (C_OUT,), dtype=jnp.float32)
        mean = 0.1 * jax.random.normal(kk[2], (C_OUT,), dtype=jnp.float32)
        var = 0.5 + jax.random.uniform(kk[3], (C_OUT,), dtype=jnp.float32)
        return (gamma, beta, mean, var)

    bn1 = make_bn(ks[7])
    bn2 = make_bn(ks[8])
    bnd = make_bn(ks[9])

    params = (w1, b1, w2, b2, wd, bd, bn1, bn2, bnd)

    out = temporal_res_block(x, params)
    out = jax.block_until_ready(out)

    ref = jax.block_until_ready(forward_ref(x, params))
    np.testing.assert_allclose(np.asarray(out), np.asarray(ref),
                               rtol=1e-4, atol=1e-4)

    assert out.shape == (N, C_OUT, L1)
    print("KERNEL_OK")
</pallas_src>

<mosaic_0001>
module attributes {stable_mosaic.version = 11 : i64} {
  func.func @tres_block_kernel(%arg0: i32, %arg1: memref<2x4x16xf32, #tpu.memory_space<vmem>>, %arg2: memref<32x24xf32, #tpu.memory_space<vmem>>, %arg3: memref<8x28xf32, #tpu.memory_space<vmem>>, %arg4: memref<24x28xf32, #tpu.memory_space<vmem>>, %arg5: memref<24x28xf32, #tpu.memory_space<vmem>>) attributes {dimension_semantics = [#tpu.dimension_semantics<arbitrary>], iteration_bounds = array<i64: 1>, scalar_prefetch = 0 : i64, scratch_operands = 2 : i64, tpu.core_type = #tpu.core_type<tc>, window_params = [{pipeline_mode = #tpu.pipeline_mode<synchronous>, transform_indices = @transform_0, window_bounds = array<i64: 2, 4, 16>}, {pipeline_mode = #tpu.pipeline_mode<synchronous>, transform_indices = @transform_1, window_bounds = array<i64: 32, 24>}, {pipeline_mode = #tpu.pipeline_mode<synchronous>, transform_indices = @transform_2, window_bounds = array<i64: 8, 28>}]} {
    %c0 = arith.constant 0 : index
    %c0_0 = arith.constant 0 : index
    %0 = vector.load %arg2[%c0, %c0_0] : memref<32x24xf32, #tpu.memory_space<vmem>>, vector<16x24xf32>
    %c16 = arith.constant 16 : index
    %c0_1 = arith.constant 0 : index
    %1 = vector.load %arg2[%c16, %c0_1] : memref<32x24xf32, #tpu.memory_space<vmem>>, vector<8x24xf32>
    %c24 = arith.constant 24 : index
    %c0_2 = arith.constant 0 : index
    %2 = vector.load %arg2[%c24, %c0_2] : memref<32x24xf32, #tpu.memory_space<vmem>>, vector<8x6xf32>
    %3 = vector.extract_strided_slice %2 {offsets = [0, 0], sizes = [8, 1], strides = [1, 1]} : vector<8x6xf32> to vector<8x1xf32>
    %4 = vector.shape_cast %3 : vector<8x1xf32> to vector<8x1xf32>
    %5 = vector.broadcast %4 : vector<8x1xf32> to vector<8x28xf32>
    %6 = vector.extract_strided_slice %2 {offsets = [0, 1], sizes = [8, 1], strides = [1, 1]} : vector<8x6xf32> to vector<8x1xf32>
    %7 = vector.shape_cast %6 : vector<8x1xf32> to vector<8x1xf32>
    %8 = vector.broadcast %7 : vector<8x1xf32> to vector<8x28xf32>
    %9 = vector.extract_strided_slice %2 {offsets = [0, 2], sizes = [8, 1], strides = [1, 1]} : vector<8x6xf32> to vector<8x1xf32>
    %10 = vector.shape_cast %9 : vector<8x1xf32> to vector<8x1xf32>
    %11 = vector.broadcast %10 : vector<8x1xf32> to vector<8x28xf32>
    %12 = vector.extract_strided_slice %2 {offsets = [0, 3], sizes = [8, 1], strides = [1, 1]} : vector<8x6xf32> to vector<8x1xf32>
    %13 = vector.shape_cast %12 : vector<8x1xf32> to vector<8x1xf32>
    %14 = vector.broadcast %13 : vector<8x1xf32> to vector<8x28xf32>
    %15 = vector.extract_strided_slice %2 {offsets = [0, 4], sizes = [8, 1], strides = [1, 1]} : vector<8x6xf32> to vector<8x1xf32>
    %16 = vector.shape_cast %15 : vector<8x1xf32> to vector<8x1xf32>
    %17 = vector.broadcast %16 : vector<8x1xf32> to vector<8x28xf32>
    %18 = vector.extract_strided_slice %2 {offsets = [0, 5], sizes = [8, 1], strides = [1, 1]} : vector<8x6xf32> to vector<8x1xf32>
    %19 = vector.shape_cast %18 : vector<8x1xf32> to vector<8x1xf32>
    %20 = vector.broadcast %19 : vector<8x1xf32> to vector<8x28xf32>
    %cst = arith.constant 0.000000e+00 : f32
    %21 = vector.broadcast %cst : f32 to vector<24x28xf32>
    %c0_3 = arith.constant 0 : index
    %c0_4 = arith.constant 0 : index
    %22 = vector.load %arg4[%c0_3, %c0_4] : memref<24x28xf32, #tpu.memory_space<vmem>>, vector<24x28xf32>
    tpu.vector_store %arg4[%c0_3, %c0_4], %21 {strides = array<i32>} : memref<24x28xf32, #tpu.memory_space<vmem>>, vector<24x28xf32>,
    %cst_5 = arith.constant 0.000000e+00 : f32
    %23 = vector.broadcast %cst_5 : f32 to vector<24x28xf32>
    %c0_6 = arith.constant 0 : index
    %c0_7 = arith.constant 0 : index
    %24 = vector.load %arg5[%c0_6, %c0_7] : memref<24x28xf32, #tpu.memory_space<vmem>>, vector<24x28xf32>
    tpu.vector_store %arg5[%c0_6, %c0_7], %23 {strides = array<i32>} : memref<24x28xf32, #tpu.memory_space<vmem>>, vector<24x28xf32>,
    %c0_8 = arith.constant 0 : index
    %c0_9 = arith.constant 0 : index
    %c0_10 = arith.constant 0 : index
    %25 = vector.load %arg1[%c0_8, %c0_9, %c0_10] : memref<2x4x16xf32, #tpu.memory_space<vmem>>, vector<2x4x16xf32>
    %26 = vector.extract_strided_slice %25 {offsets = [0, 0, 0], sizes = [1, 4, 14], strides = [1, 1, 1]} : vector<2x4x16xf32> to vector<1x4x14xf32>
    %27 = vector.shape_cast %26 : vector<1x4x14xf32> to vector<4x14xf32>
    %c0_11 = arith.constant 0 : index
    %c0_12 = arith.constant 0 : index
    %28 = vector.load %arg4[%c0_11, %c0_12] : memref<24x28xf32, #tpu.memory_space<vmem>>, vector<4x14xf32>
    tpu.vector_store %arg4[%c0_11, %c0_12], %27 {strides = array<i32>} : memref<24x28xf32, #tpu.memory_space<vmem>>, vector<4x14xf32>,
    %29 = vector.extract_strided_slice %25 {offsets = [0, 0, 1], sizes = [1, 4, 14], strides = [1, 1, 1]} : vector<2x4x16xf32> to vector<1x4x14xf32>
    %30 = vector.shape_cast %29 : vector<1x4x14xf32> to vector<4x14xf32>
    %c8 = arith.constant 8 : index
    %c0_13 = arith.constant 0 : index
    %31 = vector.load %arg4[%c8, %c0_13] : memref<24x28xf32, #tpu.memory_space<vmem>>, vector<4x14xf32>
    tpu.vector_store %arg4[%c8, %c0_13], %30 {strides = array<i32>} : memref<24x28xf32, #tpu.memory_space<vmem>>, vector<4x14xf32>,
    %32 = vector.extract_strided_slice %25 {offsets = [0, 0, 2], sizes = [1, 4, 14], strides = [1, 1, 1]} : vector<2x4x16xf32> to vector<1x4x14xf32>
    %33 = vector.shape_cast %32 : vector<1x4x14xf32> to vector<4x14xf32>
    %c16_14 = arith.constant 16 : index
    %c0_15 = arith.constant 0 : index
    %34 = vector.load %arg4[%c16_14, %c0_15] : memref<24x28xf32, #tpu.memory_space<vmem>>, vector<4x14xf32>
    tpu.vector_store %arg4[%c16_14, %c0_15], %33 {strides = array<i32>} : memref<24x28xf32, #tpu.memory_space<vmem>>, vector<4x14xf32>,
    %35 = vector.extract_strided_slice %25 {offsets = [1, 0, 0], sizes = [1, 4, 14], strides = [1, 1, 1]} : vector<2x4x16xf32> to vector<1x4x14xf32>
    %36 = vector.shape_cast %35 : vector<1x4x14xf32> to vector<4x14xf32>
    %c0_16 = arith.constant 0 : index
    %c14 = arith.constant 14 : index
    %37 = vector.load %arg4[%c0_16, %c14] : memref<24x28xf32, #tpu.memory_space<vmem>>, vector<4x14xf32>
    tpu.vector_store %arg4[%c0_16, %c14], %36 {strides = array<i32>} : memref<24x28xf32, #tpu.memory_space<vmem>>, vector<4x14xf32>,
    %38 = vector.extract_strided_slice %25 {offsets = [1, 0, 1], sizes = [1, 4, 14], strides = [1, 1, 1]} : vector<2x4x16xf32> to vector<1x4x14xf32>
    %39 = vector.shape_cast %38 : vector<1x4x14xf32> to vector<4x14xf32>
    %c8_17 = arith.constant 8 : index
    %c14_18 = arith.constant 14 : index
    %40 = vector.load %arg4[%c8_17, %c14_18] : memref<24x28xf32, #tpu.memory_space<vmem>>, vector<4x14xf32>
    tpu.vector_store %arg4[%c8_17, %c14_18], %39 {strides = array<i32>} : memref<24x28xf32, #tpu.memory_space<vmem>>, vector<4x14xf32>,
    %41 = vector.extract_strided_slice %25 {offsets = [1, 0, 2], sizes = [1, 4, 14], strides = [1, 1, 1]} : vector<2x4x16xf32> to vector<1x4x14xf32>
    %42 = vector.shape_cast %41 : vector<1x4x14xf32> to vector<4x14xf32>
    %c16_19 = arith.constant 16 : index
    %c14_20 = arith.constant 14 : index
    %43 = vector.load %arg4[%c16_19, %c14_20] : memref<24x28xf32, #tpu.memory_space<vmem>>, vector<4x14xf32>
    tpu.vector_store %arg4[%c16_19, %c14_20], %42 {strides = array<i32>} : memref<24x28xf32, #tpu.memory_space<vmem>>, vector<4x14xf32>,
    %c0_21 = arith.constant 0 : index
    %c0_22 = arith.constant 0 : index
    %44 = vector.load %arg4[%c0_21, %c0_22] : memref<24x28xf32, #tpu.memory_space<vmem>>, vector<24x28xf32>
    %cst_23 = arith.constant dense<0.000000e+00> : vector<16x28xf32>
    %45 = tpu.matmul %0, %44, %cst_23 {dimension_numbers = #tpu.dot_dimension_numbers<[1], [0], [0], [1], [0, 0, 1, 1], [], []>} : vector<16x24xf32>, vector<24x28xf32>, vector<16x28xf32> -> vector<16x28xf32>
    %46 = vector.extract_strided_slice %45 {offsets = [0, 0], sizes = [8, 28], strides = [1, 1]} : vector<16x28xf32> to vector<8x28xf32>
    %47 = vector.extract_strided_slice %45 {offsets = [8, 0], sizes = [8, 28], strides = [1, 1]} : vector<16x28xf32> to vector<8x28xf32>
    %48 = arith.addf %46, %5 : vector<8x28xf32>
    %cst_24 = arith.constant 0.000000e+00 : f32
    %49 = vector.broadcast %cst_24 : f32 to vector<8x28xf32>
    %50 = arith.maximumf %48, %49 : vector<8x28xf32>
    %51 = arith.mulf %50, %8 : vector<8x28xf32>
    %52 = arith.addf %51, %11 : vector<8x28xf32>
    %c16_25 = arith.constant 16 : index
    %c0_26 = arith.constant 0 : index
    %53 = vector.load %arg5[%c16_25, %c0_26] : memref<24x28xf32, #tpu.memory_space<vmem>>, vector<8x28xf32>
    tpu.vector_store %arg5[%c16_25, %c0_26], %52 {strides = array<i32>} : memref<24x28xf32, #tpu.memory_space<vmem>>, vector<8x28xf32>,
    %54 = vector.extract_strided_slice %52 {offsets = [0, 0], sizes = [8, 12], strides = [1, 1]} : vector<8x28xf32> to vector<8x12xf32>
    %c0_27 = arith.constant 0 : index
    %c2 = arith.constant 2 : index
    %55 = vector.load %arg5[%c0_27, %c2] : memref<24x28xf32, #tpu.memory_space<vmem>>, vector<8x12xf32>
    tpu.vector_store %arg5[%c0_27, %c2], %54 {strides = array<i32>} : memref<24x28xf32, #tpu.memory_space<vmem>>, vector<8x12xf32>,
    %56 = vector.extract_strided_slice %52 {offsets = [0, 14], sizes = [8, 12], strides = [1, 1]} : vector<8x28xf32> to vector<8x12xf32>
    %c0_28 = arith.constant 0 : index
    %c16_29 = arith.constant 16 : index
    %57 = vector.load %arg5[%c0_28, %c16_29] : memref<24x28xf32, #tpu.memory_space<vmem>>, vector<8x12xf32>
    tpu.vector_store %arg5[%c0_28, %c16_29], %56 {strides = array<i32>} : memref<24x28xf32, #tpu.memory_space<vmem>>, vector<8x12xf32>,
    %58 = vector.extract_strided_slice %52 {offsets = [0, 0], sizes = [8, 13], strides = [1, 1]} : vector<8x28xf32> to vector<8x13xf32>
    %c8_30 = arith.constant 8 : index
    %c1 = arith.constant 1 : index
    %59 = vector.load %arg5[%c8_30, %c1] : memref<24x28xf32, #tpu.memory_space<vmem>>, vector<8x13xf32>
    tpu.vector_store %arg5[%c8_30, %c1], %58 {strides = array<i32>} : memref<24x28xf32, #tpu.memory_space<vmem>>, vector<8x13xf32>,
    %60 = vector.extract_strided_slice %52 {offsets = [0, 14], sizes = [8, 13], strides = [1, 1]} : vector<8x28xf32> to vector<8x13xf32>
    %c8_31 = arith.constant 8 : index
    %c15 = arith.constant 15 : index
    %61 = vector.load %arg5[%c8_31, %c15] : memref<24x28xf32, #tpu.memory_space<vmem>>, vector<8x13xf32>
    tpu.vector_store %arg5[%c8_31, %c15], %60 {strides = array<i32>} : memref<24x28xf32, #tpu.memory_space<vmem>>, vector<8x13xf32>,
    %c0_32 = arith.constant 0 : index
    %c0_33 = arith.constant 0 : index
    %62 = vector.load %arg5[%c0_32, %c0_33] : memref<24x28xf32, #tpu.memory_space<vmem>>, vector<24x28xf32>
    %cst_34 = arith.constant dense<0.000000e+00> : vector<8x28xf32>
    %63 = tpu.matmul %1, %62, %cst_34 {dimension_numbers = #tpu.dot_dimension_numbers<[1], [0], [0], [1], [0, 0, 1, 1], [], []>} : vector<8x24xf32>, vector<24x28xf32>, vector<8x28xf32> -> vector<8x28xf32>
    %64 = arith.addf %63, %14 : vector<8x28xf32>
    %cst_35 = arith.constant 0.000000e+00 : f32
    %65 = vector.broadcast %cst_35 : f32 to vector<8x28xf32>
    %66 = arith.maximumf %64, %65 : vector<8x28xf32>
    %67 = arith.mulf %66, %17 : vector<8x28xf32>
    %68 = arith.addf %67, %47 : vector<8x28xf32>
    %69 = arith.addf %68, %20 : vector<8x28xf32>
    %c0_36 = arith.constant 0 : index
    %c0_37 = arith.constant 0 : index
    %70 = vector.load %arg3[%c0_36, %c0_37] : memref<8x28xf32, #tpu.memory_space<vmem>>, vector<8x28xf32>
    tpu.vector_store %arg3[%c0_36, %c0_37], %69 {strides = array<i32>} : memref<8x28xf32, #tpu.memory_space<vmem>>, vector<8x28xf32>,
    return
  }
  func.func @transform_0(%arg0: i32) -> (i32, i32, i32) {
    %c0_i32 = arith.constant 0 : i32
    %c0_i32_0 = arith.constant 0 : i32
    %c0_i32_1 = arith.constant 0 : i32
    %c0_i32_2 = arith.constant 0 : i32
    return %c0_i32, %c0_i32_0, %c0_i32_1 : i32, i32, i32
  }
  func.func @transform_1(%arg0: i32) -> (i32, i32) {
    %c0_i32 = arith.constant 0 : i32
    %c0_i32_0 = arith.constant 0 : i32
    %c0_i32_1 = arith.constant 0 : i32
    return %c0_i32, %c0_i32_0 : i32, i32
  }
  func.func @transform_2(%arg0: i32) -> (i32, i32) {
    %c0_i32 = arith.constant 0 : i32
    %c0_i32_0 = arith.constant 0 : i32
    %c0_i32_1 = arith.constant 0 : i32
    return %c0_i32, %c0_i32_0 : i32, i32
  }
}

</mosaic_0001>

<llo_original>
// kernel: tpu_custom_call.1
$region0: #{tpu_custom_call.1}
  #allocation0 [shape = 'u32[]', space=smem, size = 0x4, offset = 0x4, fixed_abs, tag = 'smem constant byte address 0x4 - core index']
  #allocation1 [shape = 'u32[144,128]{1,0:T(1,128)}', space=vmem, size = 0x12000, scoped, tag = 'internal scratch']
  #allocation2 [shape = 'f32[24,28]{1,0:T(8,128)}', space=vmem, size = 0x3000, scoped, tag = 'scratch operand']
  #allocation3 [shape = 'f32[24,28]{1,0:T(8,128)}', space=vmem, size = 0x3000, scoped, tag = 'scratch operand']
  %s0 = inlined_call_operand.vmem [shape: f32[2,4,16], index: 0, kind: input, shape index: {}]
  %s1 = inlined_call_operand.vmem [shape: f32[32,24], index: 1, kind: input, shape index: {}]
  %s2 = inlined_call_operand.hbm [shape: f32[8,28], index: 2, kind: output, shape index: {}]
  %s3 = sld [smem:[#allocation0]]
  $region18: #{tpu_custom_call.1} parent=0
    _
  %s5 = ssub.s32 1, %s3
  %s6 = scalar_select 0, %s5, %s3
  $region1: #{tpu_custom_call.1} parent=0
    #allocation4 [shape = 'u8[4096]{0}', space=vmem, size = 0x1000, scoped, tag = 'output window, operand 0, single buffered']
    #allocation5 [shape = 's32[1]{0}', space=sflag, size = 0x4, scoped, tag = 'scoped memory for tpu_custom_call.1']
    %7 = vsyncpa [#allocation5], 0
    // Predicated region
    $region2: #{tpu_custom_call.1} parent=1 // pred_check
      _
    $region3: #{tpu_custom_call.1} parent=1 // pred_check_branch
      %9 = sbr.rel (0) target = $region5
    $region4: #{tpu_custom_call.1} parent=1 // pred_region
      _
    $region5: #{tpu_custom_call.1} parent=1 // pred_fallthru
      _
    // Predicated region
    $region6: #{tpu_custom_call.1} parent=1 // pred_check
      _
    $region7: #{tpu_custom_call.1} parent=1 // pred_check_branch
      %11 = sbr.rel (0) target = $region9
    $region8: #{tpu_custom_call.1} parent=1 // pred_region
      _
    $region9: #{tpu_custom_call.1} parent=1 // pred_fallthru
      _
    %v12 = vld [vmem:[%s1] sm:$0xff]
    %v13 = vld [vmem:[%s1 + $0x8] sm:$0xff]
    %v14 = vld [vmem:[%s1 + $0x10] sm:$0xff]
    %v15 = vld [vmem:[%s1 + $0x18] sm:$0xff]
    %17 = vset.pattern.permute.xlu0 0
    %18 = vperm.xlu0 %17, %v15
    %v19 = vpop.permute.xlu0 %18
    %21 = vset.pattern.permute.xlu0 1
    %22 = vperm.xlu0 %21, %v15
    %v23 = vpop.permute.xlu0 %22
    %25 = vset.pattern.permute.xlu0 2
    %26 = vperm.xlu0 %25, %v15
    %v27 = vpop.permute.xlu0 %26
    %29 = vset.pattern.permute.xlu0 3
    %30 = vperm.xlu0 %29, %v15
    %v31 = vpop.permute.xlu0 %30
    %33 = vset.pattern.permute.xlu0 4
    %34 = vperm.xlu0 %33, %v15
    %v35 = vpop.permute.xlu0 %34
    %37 = vset.pattern.permute.xlu0 5
    %38 = vperm.xlu0 %37, %v15
    %v39 = vpop.permute.xlu0 %38
    %vm41 = vcmask 228352
    %42 = vst.msk [vmem:[#allocation2] sm:$0xff] %vm41, 0.0
    %43 = vst.msk [vmem:[#allocation2 + $0x8] sm:$0xff] %vm41, 0.0
    %44 = vst.msk [vmem:[#allocation2 + $0x10] sm:$0xff] %vm41, 0.0
    %45 = vst.msk [vmem:[#allocation3] sm:$0xff] %vm41, 0.0
    %46 = vst.msk [vmem:[#allocation3 + $0x8] sm:$0xff] %vm41, 0.0
    %47 = vst.msk [vmem:[#allocation3 + $0x10] sm:$0xff] %vm41, 0.0
    %v48 = vld [vmem:[%s0] sm:$0xf]
    %v49 = vld [vmem:[%s0 + $0x4] sm:$0xf]
    %vm50 = vcmask 109568
    %51 = vst.msk [vmem:[#allocation2] sm:$0xf] %vm50, %v48
    %53 = vrot.lane.b32.xlu0 %v48, 127
    %v54 = vpop.permute.xlu0 %53
    %56 = vst.msk [vmem:[#allocation2 + $0x8] sm:$0xf] %vm50, %v54
    %57 = vrot.lane.b32.xlu0 %v48, 126
    %v58 = vpop.permute.xlu0 %57
    %60 = vst.msk [vmem:[#allocation2 + $0x10] sm:$0xf] %vm50, %v58
    %62 = vrot.lane.b32.xlu0 %v49, 14
    %v63 = vpop.permute.xlu0 %62
    %vm65 = vcmask 224368
    %66 = vst.msk [vmem:[#allocation2] sm:$0xf] %vm65, %v63
    %67 = vrot.lane.b32.xlu0 %v49, 13
    %v68 = vpop.permute.xlu0 %67
    %70 = vst.msk [vmem:[#allocation2 + $0x8] sm:$0xf] %vm65, %v68
    %71 = vrot.lane.b32.xlu0 %v49, 12
    %v72 = vpop.permute.xlu0 %71
    %74 = vst.msk [vmem:[#allocation2 + $0x10] sm:$0xf] %vm65, %v72
    %v75 = vld [vmem:[#allocation2] sm:$0xff]
    %v76 = vld [vmem:[#allocation2 + $0x8] sm:$0xff]
    %v77 = vld [vmem:[#allocation2 + $0x10] sm:$0xff]
    %vm78 = vcmask 195584
    %v80 = vsel %vm78, %v12, 0
    %v83 = vsel %vm78, %v13, 0
    %85 = vmatprep.subr.mxu0 0.0
    %86 = vmatpush1.msra.mxu0 %v75
    %87 = vmatprep.subr.mxu0 0.0
    %88 = vmatpush1.msra.mxu0 %v76
    %89 = vmatprep.subr.mxu0 0.0
    %90 = vmatpush1.msra.mxu0 %v77
    %91 = vmatprep.subr.mxu0 0.0
    %92 = vmatpush1.msra.mxu0 0.0
    %93 = vmatprep.subr.mxu0 0.0
    %94 = vmatpush1.msra.mxu0 0.0
    %95 = vmatprep.subr.mxu0 0.0
    %96 = vmatpush1.msra.mxu0 0.0
    %97 = vmatprep.subr.mxu0 0.0
    %98 = vmatpush1.msra.mxu0 0.0
    %99 = vmatprep.subr.mxu0 0.0
    %100 = vmatpush1.msra.mxu0 0.0
    %101 = vmatprep.subr.mxu0 0.0
    %102 = vmatpush1.msra.mxu0 0.0
    %103 = vmatprep.subr.mxu0 0.0
    %104 = vmatpush1.msra.mxu0 0.0
    %105 = vmatprep.subr.mxu0 0.0
    %106 = vmatpush1.msra.mxu0 0.0
    %107 = vmatprep.subr.mxu0 0.0
    %108 = vmatpush1.msra.mxu0 0.0
    %109 = vmatprep.subr.mxu0 0.0
    %110 = vmatpush1.msra.mxu0 0.0
    %111 = vmatprep.subr.mxu0 0.0
    %112 = vmatpush1.msra.mxu0 0.0
    %113 = vmatprep.subr.mxu0 0.0
    %114 = vmatpush1.msra.mxu0 0.0
    %115 = vmatprep.subr.mxu0 0.0
    %116 = vmatpush1.msra.mxu0 0.0
    %117 = vmatprep.subr.mxu0 0.0
    %118 = vmatpush1.msra.mxu0 0.0
    %119 = vmatprep.subr.mxu0 0.0
    %120 = vmatpush1.msra.mxu0 0.0
    %121 = vmatprep.subr.mxu0 0.0
    %122 = vmatpush1.msra.mxu0 0.0
    %123 = vmatprep.subr.mxu0 0.0
    %124 = vmatpush1.msra.mxu0 0.0
    %125 = vmatprep.subr.mxu0 0.0
    %126 = vmatpush1.msra.mxu0 0.0
    %127 = vmatprep.subr.mxu0 0.0
    %128 = vmatpush1.msra.mxu0 0.0
    %129 = vmatprep.subr.mxu0 0.0
    %130 = vmatpush1.msra.mxu0 0.0
    %131 = vmatprep.subr.mxu0 0.0
    %132 = vmatpush1.msra.mxu0 0.0
    %133 = vmatprep.subr.mxu0 0.0
    %134 = vmatpush1.msra.mxu0 0.0
    %135 = vmatprep.subr.mxu0 0.0
    %136 = vmatpush1.msra.mxu0 0.0
    %137 = vmatprep.subr.mxu0 0.0
    %138 = vmatpush1.msra.mxu0 0.0
    %139 = vmatprep.subr.mxu0 0.0
    %140 = vmatpush1.msra.mxu0 0.0
    %141 = vmatprep.subr.mxu0 0.0
    %142 = vmatpush1.msra.mxu0 0.0
    %143 = vmatprep.subr.mxu0 0.0
    %144 = vmatpush1.msra.mxu0 0.0
    %145 = vmatprep.subr.mxu0 0.0
    %146 = vmatpush1.msra.mxu0 0.0
    %147 = vmatprep.subr.mxu0 0.0
    %148 = vmatpush1.msra.mxu0 0.0
    %149 = vmatprep.mubr.f32.mxu0 0.0
    %150 = vmatmul.mubr.f32.gmra.mrb[0].mxu0 %v80
    %v151 = vpop.f32.mrb[0].mxu0
    %v152 = vadd.f32 0.0, %v151
    %v153 = vpop.f32.mrb[0].mxu0
    %154 = vmatprep.mubr.f32.mxu0 0.0
    %155 = vmatmul.mubr.f32.gmra.mrb[0].mxu0 %v83
    %v156 = vpop.f32.mrb[0].mxu0
    %v157 = vadd.f32 0.0, %v156
    %v158 = vpop.f32.mrb[0].mxu0
    %159 = vdwg.mxu0
    %v160 = vadd.f32 %v152, %v19
    %v161 = vmax.f32 %v160, 0.0
    %v162 = vmul.f32 %v161, %v23
    %v163 = vadd.f32 %v162, %v27
    %164 = vst.msk [vmem:[#allocation3 + $0x10] sm:$0xff] %vm41, %v163
    %166 = vrot.lane.b32.xlu0 %v163, 2
    %v167 = vpop.permute.xlu0 %166
    %vm169 = vcmask 113680
    %170 = vst.msk [vmem:[#allocation3] sm:$0xff] %vm169, %v167
    %vm171 = vcmask 228480
    %172 = vst.msk [vmem:[#allocation3] sm:$0xff] %vm171, %v167
    %173 = vrot.lane.b32.xlu0 %v163, 1
    %v174 = vpop.permute.xlu0 %173
    %vm176 = vcmask 113672
    %177 = vst.msk [vmem:[#allocation3 + $0x8] sm:$0xff] %vm176, %v174
    %vm178 = vcmask 228472
    %179 = vst.msk [vmem:[#allocation3 + $0x8] sm:$0xff] %vm178, %v174
    %v180 = vld [vmem:[#allocation3] sm:$0xff]
    %v181 = vld [vmem:[#allocation3 + $0x8] sm:$0xff]
    %v182 = vld [vmem:[#allocation3 + $0x10] sm:$0xff]
    %v184 = vsel %vm78, %v14, 0
    %186 = vmatprep.subr.mxu0 0.0
    %187 = vmatpush1.msra.mxu0 %v180
    %188 = vmatprep.subr.mxu0 0.0
    %189 = vmatpush1.msra.mxu0 %v181
    %190 = vmatprep.subr.mxu0 0.0
    %191 = vmatpush1.msra.mxu0 %v182
    %192 = vmatprep.subr.mxu0 0.0
    %193 = vmatpush1.msra.mxu0 0.0
    %194 = vmatprep.subr.mxu0 0.0
    %195 = vmatpush1.msra.mxu0 0.0
    %196 = vmatprep.subr.mxu0 0.0
    %197 = vmatpush1.msra.mxu0 0.0
    %198 = vmatprep.subr.mxu0 0.0
    %199 = vmatpush1.msra.mxu0 0.0
    %200 = vmatprep.subr.mxu0 0.0
    %201 = vmatpush1.msra.mxu0 0.0
    %202 = vmatprep.subr.mxu0 0.0
    %203 = vmatpush1.msra.mxu0 0.0
    %204 = vmatprep.subr.mxu0 0.0
    %205 = vmatpush1.msra.mxu0 0.0
    %206 = vmatprep.subr.mxu0 0.0
    %207 = vmatpush1.msra.mxu0 0.0
    %208 = vmatprep.subr.mxu0 0.0
    %209 = vmatpush1.msra.mxu0 0.0
    %210 = vmatprep.subr.mxu0 0.0
    %211 = vmatpush1.msra.mxu0 0.0
    %212 = vmatprep.subr.mxu0 0.0
    %213 = vmatpush1.msra.mxu0 0.0
    %214 = vmatprep.subr.mxu0 0.0
    %215 = vmatpush1.msra.mxu0 0.0
    %216 = vmatprep.subr.mxu0 0.0
    %217 = vmatpush1.msra.mxu0 0.0
    %218 = vmatprep.subr.mxu0 0.0
    %219 = vmatpush1.msra.mxu0 0.0
    %220 = vmatprep.subr.mxu0 0.0
    %221 = vmatpush1.msra.mxu0 0.0
    %222 = vmatprep.subr.mxu0 0.0
    %223 = vmatpush1.msra.mxu0 0.0
    %224 = vmatprep.subr.mxu0 0.0
    %225 = vmatpush1.msra.mxu0 0.0
    %226 = vmatprep.subr.mxu0 0.0
    %227 = vmatpush1.msra.mxu0 0.0
    %228 = vmatprep.subr.mxu0 0.0
    %229 = vmatpush1.msra.mxu0 0.0
    %230 = vmatprep.subr.mxu0 0.0
    %231 = vmatpush1.msra.mxu0 0.0
    %232 = vmatprep.subr.mxu0 0.0
    %233 = vmatpush1.msra.mxu0 0.0
    %234 = vmatprep.subr.mxu0 0.0
    %235 = vmatpush1.msra.mxu0 0.0
    %236 = vmatprep.subr.mxu0 0.0
    %237 = vmatpush1.msra.mxu0 0.0
    %238 = vmatprep.subr.mxu0 0.0
    %239 = vmatpush1.msra.mxu0 0.0
    %240 = vmatprep.subr.mxu0 0.0
    %241 = vmatpush1.msra.mxu0 0.0
    %242 = vmatprep.subr.mxu0 0.0
    %243 = vmatpush1.msra.mxu0 0.0
    %244 = vmatprep.subr.mxu0 0.0
    %245 = vmatpush1.msra.mxu0 0.0
    %246 = vmatprep.subr.mxu0 0.0
    %247 = vmatpush1.msra.mxu0 0.0
    %248 = vmatprep.subr.mxu0 0.0
    %249 = vmatpush1.msra.mxu0 0.0
    %250 = vmatprep.mubr.f32.mxu0 0.0
    %251 = vmatmul.mubr.f32.gmra.mrb[0].mxu0 %v184
    %v252 = vpop.f32.mrb[0].mxu0
    %v253 = vadd.f32 %v31, %v252
    %v254 = vpop.f32.mrb[0].mxu0
    %255 = vdwg.mxu0
    %v256 = vmax.f32 %v253, 0.0
    %v257 = vmul.f32 %v256, %v35
    %v258 = vadd.f32 %v257, %v157
    %v259 = vadd.f32 %v258, %v39
    %260 = vst.msk [vmem:[#allocation4] sm:$0xff] %vm41, %v259
    // Predicated region
    $region10: #{tpu_custom_call.1} parent=1 // pred_check
      _
    $region11: #{tpu_custom_call.1} parent=1 // pred_check_branch
      %262 = sbr.rel (0) target = $region13
    $region12: #{tpu_custom_call.1} parent=1 // pred_region
      %s264 = ssub.s32 128, 128
      %265 = vsyncadd [#allocation5], %s264
      %s267 = sshll.u32 [#allocation4], 4
      %s268 = int_to_ptr.vmem [resolvable:$true] %s267
      %270 = dma.vmem_to_hbm [thread:$0]  %s268, 128, %s2, [#allocation5]
    $region13: #{tpu_custom_call.1} parent=1 // pred_fallthru
      _
    // Predicated region
    $region14: #{tpu_custom_call.1} parent=1 // pred_check
      _
    $region15: #{tpu_custom_call.1} parent=1 // pred_check_branch
      %272 = sbr.rel (0) target = $region17
    $region16: #{tpu_custom_call.1} parent=1 // pred_region
      %273 = dma.done [#allocation5], 128
    $region17: #{tpu_custom_call.1} parent=1 // pred_fallthru
      _
    %274 = vsyncpa [#allocation5], 1

</llo_original>
